<compile_context>
chip_gen: v6e
topology: v6e:2x2x1
jax: 0.10.0
libtpu: 0.0.40
codegen_flags: <defaults>
</compile_context>

<pallas_src>
import jax
import jax.numpy as jnp
import numpy as np
from jax.experimental import pallas as pl
from jax.experimental.pallas import tpu as pltpu

K1 = 5            # branch1 depthwise kernel size
K2 = 3            # branch2 depthwise kernel size
NEG_SLOPE = 0.01  # nn.LeakyReLU default negative_slope


def ffn_kernel(xp_ref, m_ref, o_ref):
    # xp_ref: (Bt, Hp, WpC)  padded input, lane index = x*C + c
    # m_ref : (K1, WpC, WC)  folded depthwise(5x5/3x3)+1x1 matrices, one per dy
    # o_ref : (Bt, H, WC)
    Bt, H, WC = o_ref.shape
    WpC = xp_ref.shape[-1]

    def band(dy):
        # Rows h..h+H-1 at sublane offset dy; merge (Bt, H) into one fat matmul
        # operand (for the shipped test Bt == 1, so this is a trivial squeeze).
        return xp_ref[:, dy:dy + H, :].reshape(Bt * H, WpC)

    # y = sum_dy band(dy) @ M[dy]  (depthwise conv + concat + 1x1 conv, fused
    # on the MXU; accumulator initialised from the first matmul).
    acc = jnp.dot(band(0), m_ref[0], preferred_element_type=jnp.float32)
    for dy in range(1, K1):
        acc = acc + jnp.dot(band(dy), m_ref[dy],
                            preferred_element_type=jnp.float32)

    # LeakyReLU(negative_slope=0.01)
    y = jnp.where(acc >= 0, acc, NEG_SLOPE * acc)
    o_ref[...] = y.reshape(Bt, H, WC).astype(o_ref.dtype)


def _pick_batch_block(batch, per_sample_bytes, target_bytes=6 << 20):
    """Largest divisor of `batch` keeping a grid step under ~6 MiB while
    leaving at least 2 grid steps (so both v7x TensorCores get work and the
    BlockSpec pipeline can overlap DMA with compute)."""
    cap = max(1, batch // 2)
    best = 1
    for d in range(1, cap + 1):
        if batch % d == 0 and d * per_sample_bytes <= target_bytes:
            best = d
    return best


def _vmem_limit_bytes():
    """~70% of physical VMEM, capped at 64 MiB (leaves headroom on v7x)."""
    try:
        cap = pltpu.get_tpu_info().vmem_capacity_bytes
        return min(int(cap * 0.7), 64 * 1024 * 1024)
    except Exception:
        return 40 * 1024 * 1024   # above 16/32 MiB scoped defaults, below v7x physical


def ffn_forward(x, w1, w2, w3):
    """x : (B, C, H, W) f32 (NCHW, like PyTorch).
    w1: (C//2, K1, K1) depthwise 5x5 weight, w2: (C//2, K2, K2) depthwise 3x3,
    w3: (C, C) 1x1 conv weight."""
    B, C, H, W = x.shape
    C2 = C // 2
    p = K1 // 2                      # unified spatial padding (3x3 window sits inside)
    Hp, Wp = H + 2 * p, W + 2 * p
    WC, WpC = W * C, Wp * C

    # ---- single fused layout transform + pad (one HBM intermediate) -------
    # NCHW -> (B, H, W*C) with lane = x*C + c; pad H by p and lanes by p*C
    # (lane-padding by whole pixel groups == spatial W padding).
    x_flat = jnp.transpose(x, (0, 2, 3, 1)).reshape(B, H, WC)
    xp = jnp.pad(x_flat, ((0, 0), (p, p), (p * C, p * C)))          # (B, Hp, WpC)

    # ---- fused depthwise weight table --------------------------------------
    # channel c < C2 -> 5x5 weights; c >= C2 -> 3x3 weights embedded in the
    # 5x5 frame (zeros outside the 3x3 window).  Reproduces split/concat.
    dw = jnp.zeros((C, K1, K1), jnp.float32)
    dw = dw.at[:C2].set(w1.astype(jnp.float32))
    off = (K1 - K2) // 2
    dw = dw.at[C2:, off:off + K2, off:off + K2].set(w2.astype(jnp.float32))

    # ---- fold depthwise + 1x1 conv into K1 per-dy MXU matrices -------------
    # M[dy][x*C + ci, w*C + co] = dw[ci, dy, x - w] * w3[co, ci]  (0 <= x-w < K1)
    x_idx = jnp.arange(Wp)[:, None]                       # (Wp, 1)
    w_idx = jnp.arange(W)[None, :]                        # (1, W)
    dxm = x_idx - w_idx                                   # (Wp, W)
    valid = (dxm >= 0) & (dxm < K1)
    tap = jnp.where(valid[None, :, :, None],
                    jnp.transpose(dw, (1, 2, 0))[:, jnp.clip(dxm, 0, K1 - 1), :],
                    0.0)                                  # (K1, Wp, W, C)
    M = jnp.einsum('dxwi,oi->dxiwo', tap,
                   w3.astype(jnp.float32)).reshape(K1, WpC, WC)

    if K1 * WpC * WC * 4 > 8 * 1024 * 1024:
        # TODO(synk): at production shapes (base_channels=128, large W) the
        # folded matrices scale as (W*C)^2; switch to a channels-on-lanes
        # layout with VPU depthwise taps + a plain (rows, C) @ w3.T matmul.
        raise NotImplementedError(
            "MXU-folded FFN path only supports small W*C working sets")

    # ---- batch blocking: several samples per grid step ---------------------
    per_sample_bytes = (Hp * WpC + H * WC) * 4
    Bt = _pick_batch_block(B, per_sample_bytes)

    out_flat = pl.pallas_call(
        ffn_kernel,
        out_shape=jax.ShapeDtypeStruct((B, H, WC), x.dtype),
        grid_spec=pltpu.PrefetchScalarGridSpec(
            num_scalar_prefetch=0,
            grid=(B // Bt,),
            in_specs=[
                pl.BlockSpec((Bt, Hp, WpC), lambda b: (b, 0, 0)),
                pl.BlockSpec((K1, WpC, WC), lambda b: (0, 0, 0)),
            ],
            out_specs=pl.BlockSpec((Bt, H, WC), lambda b: (b, 0, 0)),
        ),
        compiler_params=pltpu.CompilerParams(
            dimension_semantics=("parallel",),
            vmem_limit_bytes=_vmem_limit_bytes(),
        ),
    )(xp, M)

    # Back to NCHW only to match the PyTorch API (drop if consumer takes NHWC).
    return jnp.transpose(out_flat.reshape(B, H, W, C), (0, 3, 1, 2))


def ffn_reference(x, w1, w2, w3):
    """Pure-JAX reference (matches PyTorch FFN.forward)."""
    C = x.shape[1]
    C2 = C // 2
    dn = ('NCHW', 'OIHW', 'NCHW')
    hi = jax.lax.Precision.HIGHEST
    y1 = jax.lax.conv_general_dilated(
        x[:, :C2], w1[:, None], (1, 1),
        [(K1 // 2, K1 // 2), (K1 // 2, K1 // 2)],
        dimension_numbers=dn, feature_group_count=C2, precision=hi)
    y2 = jax.lax.conv_general_dilated(
        x[:, C2:], w2[:, None], (1, 1),
        [(K2 // 2, K2 // 2), (K2 // 2, K2 // 2)],
        dimension_numbers=dn, feature_group_count=C2, precision=hi)
    y = jnp.concatenate([y1, y2], axis=1)
    out = jax.lax.conv_general_dilated(
        y, w3[:, :, None, None], (1, 1), [(0, 0), (0, 0)],
        dimension_numbers=dn, precision=hi)
    return jnp.where(out >= 0, out, NEG_SLOPE * out)


if __name__ == "__main__":
    B, C, H, W = 2, 8, 16, 16        # in_channels=8 (divisible by groups=4); W*C = 128
    key = jax.random.PRNGKey(0)
    kx, k1, k2, k3 = jax.random.split(key, 4)

    x = jax.random.normal(kx, (B, C, H, W), jnp.float32)
    # synthetic parameters, shapes follow nn.Conv2d weights in FFN.__init__
    w1 = jax.random.normal(k1, (C // 2, K1, K1), jnp.float32) * 0.2   # depthwise 5x5
    w2 = jax.random.normal(k2, (C // 2, K2, K2), jnp.float32) * 0.2   # depthwise 3x3
    w3 = jax.random.normal(k3, (C, C), jnp.float32) * 0.2             # 1x1 conv

    out = jax.block_until_ready(ffn_forward(x, w1, w2, w3))
    ref = ffn_reference(x, w1, w2, w3)

    assert out.shape == (B, C, H, W)
    np.testing.assert_allclose(np.asarray(out), np.asarray(ref),
                               rtol=1e-3, atol=1e-3)
    print("KERNEL_OK")
</pallas_src>

<mosaic_0001>
module attributes {stable_mosaic.version = 11 : i64} {
  func.func @ffn_kernel(%arg0: i32, %arg1: memref<1x20x160xf32, #tpu.memory_space<vmem>>, %arg2: memref<5x160x128xf32, #tpu.memory_space<vmem>>, %arg3: memref<1x16x128xf32, #tpu.memory_space<vmem>>) attributes {dimension_semantics = [#tpu.dimension_semantics<parallel>], iteration_bounds = array<i64: 2>, scalar_prefetch = 0 : i64, scratch_operands = 0 : i64, tpu.core_type = #tpu.core_type<tc>, window_params = [{transform_indices = @transform_0, window_bounds = array<i64: 1, 20, 160>}, {pipeline_mode = #tpu.pipeline_mode<synchronous>, transform_indices = @transform_1, window_bounds = array<i64: 5, 160, 128>}, {transform_indices = @transform_2, window_bounds = array<i64: 1, 16, 128>}]} {
    %c0 = arith.constant 0 : index
    %c0_0 = arith.constant 0 : index
    %c0_1 = arith.constant 0 : index
    %0 = vector.load %arg1[%c0, %c0_0, %c0_1] : memref<1x20x160xf32, #tpu.memory_space<vmem>>, vector<1x16x160xf32>
    %1 = vector.shape_cast %0 : vector<1x16x160xf32> to vector<16x160xf32>
    %c0_2 = arith.constant 0 : index
    %c0_3 = arith.constant 0 : index
    %c0_4 = arith.constant 0 : index
    %2 = vector.load %arg2[%c0_2, %c0_3, %c0_4] : memref<5x160x128xf32, #tpu.memory_space<vmem>>, vector<1x160x128xf32>
    %3 = vector.shape_cast %2 : vector<1x160x128xf32> to vector<160x128xf32>
    %cst = arith.constant dense<0.000000e+00> : vector<16x128xf32>
    %4 = tpu.matmul %1, %3, %cst {dimension_numbers = #tpu.dot_dimension_numbers<[1], [0], [0], [1], [0, 0, 1, 1], [], []>} : vector<16x160xf32>, vector<160x128xf32>, vector<16x128xf32> -> vector<16x128xf32>
    %c0_5 = arith.constant 0 : index
    %c1 = arith.constant 1 : index
    %c0_6 = arith.constant 0 : index
    %5 = vector.load %arg1[%c0_5, %c1, %c0_6] : memref<1x20x160xf32, #tpu.memory_space<vmem>>, vector<1x16x160xf32>
    %6 = vector.shape_cast %5 : vector<1x16x160xf32> to vector<16x160xf32>
    %c1_7 = arith.constant 1 : index
    %c0_8 = arith.constant 0 : index
    %c0_9 = arith.constant 0 : index
    %7 = vector.load %arg2[%c1_7, %c0_8, %c0_9] : memref<5x160x128xf32, #tpu.memory_space<vmem>>, vector<1x160x128xf32>
    %8 = vector.shape_cast %7 : vector<1x160x128xf32> to vector<160x128xf32>
    %cst_10 = arith.constant dense<0.000000e+00> : vector<16x128xf32>
    %9 = tpu.matmul %6, %8, %cst_10 {dimension_numbers = #tpu.dot_dimension_numbers<[1], [0], [0], [1], [0, 0, 1, 1], [], []>} : vector<16x160xf32>, vector<160x128xf32>, vector<16x128xf32> -> vector<16x128xf32>
    %10 = arith.addf %4, %9 : vector<16x128xf32>
    %c0_11 = arith.constant 0 : index
    %c2 = arith.constant 2 : index
    %c0_12 = arith.constant 0 : index
    %11 = vector.load %arg1[%c0_11, %c2, %c0_12] : memref<1x20x160xf32, #tpu.memory_space<vmem>>, vector<1x16x160xf32>
    %12 = vector.shape_cast %11 : vector<1x16x160xf32> to vector<16x160xf32>
    %c2_13 = arith.constant 2 : index
    %c0_14 = arith.constant 0 : index
    %c0_15 = arith.constant 0 : index
    %13 = vector.load %arg2[%c2_13, %c0_14, %c0_15] : memref<5x160x128xf32, #tpu.memory_space<vmem>>, vector<1x160x128xf32>
    %14 = vector.shape_cast %13 : vector<1x160x128xf32> to vector<160x128xf32>
    %cst_16 = arith.constant dense<0.000000e+00> : vector<16x128xf32>
    %15 = tpu.matmul %12, %14, %cst_16 {dimension_numbers = #tpu.dot_dimension_numbers<[1], [0], [0], [1], [0, 0, 1, 1], [], []>} : vector<16x160xf32>, vector<160x128xf32>, vector<16x128xf32> -> vector<16x128xf32>
    %16 = arith.addf %10, %15 : vector<16x128xf32>
    %c0_17 = arith.constant 0 : index
    %c3 = arith.constant 3 : index
    %c0_18 = arith.constant 0 : index
    %17 = vector.load %arg1[%c0_17, %c3, %c0_18] : memref<1x20x160xf32, #tpu.memory_space<vmem>>, vector<1x16x160xf32>
    %18 = vector.shape_cast %17 : vector<1x16x160xf32> to vector<16x160xf32>
    %c3_19 = arith.constant 3 : index
    %c0_20 = arith.constant 0 : index
    %c0_21 = arith.constant 0 : index
    %19 = vector.load %arg2[%c3_19, %c0_20, %c0_21] : memref<5x160x128xf32, #tpu.memory_space<vmem>>, vector<1x160x128xf32>
    %20 = vector.shape_cast %19 : vector<1x160x128xf32> to vector<160x128xf32>
    %cst_22 = arith.constant dense<0.000000e+00> : vector<16x128xf32>
    %21 = tpu.matmul %18, %20, %cst_22 {dimension_numbers = #tpu.dot_dimension_numbers<[1], [0], [0], [1], [0, 0, 1, 1], [], []>} : vector<16x160xf32>, vector<160x128xf32>, vector<16x128xf32> -> vector<16x128xf32>
    %22 = arith.addf %16, %21 : vector<16x128xf32>
    %c0_23 = arith.constant 0 : index
    %c4 = arith.constant 4 : index
    %c0_24 = arith.constant 0 : index
    %23 = vector.load %arg1[%c0_23, %c4, %c0_24] : memref<1x20x160xf32, #tpu.memory_space<vmem>>, vector<1x16x160xf32>
    %24 = vector.shape_cast %23 : vector<1x16x160xf32> to vector<16x160xf32>
    %c4_25 = arith.constant 4 : index
    %c0_26 = arith.constant 0 : index
    %c0_27 = arith.constant 0 : index
    %25 = vector.load %arg2[%c4_25, %c0_26, %c0_27] : memref<5x160x128xf32, #tpu.memory_space<vmem>>, vector<1x160x128xf32>
    %26 = vector.shape_cast %25 : vector<1x160x128xf32> to vector<160x128xf32>
    %cst_28 = arith.constant dense<0.000000e+00> : vector<16x128xf32>
    %27 = tpu.matmul %24, %26, %cst_28 {dimension_numbers = #tpu.dot_dimension_numbers<[1], [0], [0], [1], [0, 0, 1, 1], [], []>} : vector<16x160xf32>, vector<160x128xf32>, vector<16x128xf32> -> vector<16x128xf32>
    %28 = arith.addf %22, %27 : vector<16x128xf32>
    %cst_29 = arith.constant 0.000000e+00 : f32
    %29 = vector.broadcast %cst_29 : f32 to vector<16x128xf32>
    %30 = arith.cmpf oge, %28, %29 : vector<16x128xf32>
    %cst_30 = arith.constant 0.00999999977 : f32
    %31 = vector.broadcast %cst_30 : f32 to vector<16x128xf32>
    %32 = arith.mulf %31, %28 : vector<16x128xf32>
    %33 = arith.select %30, %28, %32 : vector<16x128xi1>, vector<16x128xf32>
    %34 = vector.shape_cast %33 : vector<16x128xf32> to vector<1x16x128xf32>
    %c0_31 = arith.constant 0 : index
    %c0_32 = arith.constant 0 : index
    %c0_33 = arith.constant 0 : index
    %35 = vector.load %arg3[%c0_31, %c0_32, %c0_33] : memref<1x16x128xf32, #tpu.memory_space<vmem>>, vector<1x16x128xf32>
    tpu.vector_store %arg3[%c0_31, %c0_32, %c0_33], %34 {strides = array<i32>} : memref<1x16x128xf32, #tpu.memory_space<vmem>>, vector<1x16x128xf32>,
    return
  }
  func.func @transform_0(%arg0: i32) -> (i32, i32, i32) {
    %c0_i32 = arith.constant 0 : i32
    %c0_i32_0 = arith.constant 0 : i32
    %c0_i32_1 = arith.constant 0 : i32
    return %arg0, %c0_i32, %c0_i32_0 : i32, i32, i32
  }
  func.func @transform_1(%arg0: i32) -> (i32, i32, i32) {
    %c0_i32 = arith.constant 0 : i32
    %c0_i32_0 = arith.constant 0 : i32
    %c0_i32_1 = arith.constant 0 : i32
    %c0_i32_2 = arith.constant 0 : i32
    return %c0_i32, %c0_i32_0, %c0_i32_1 : i32, i32, i32
  }
  func.func @transform_2(%arg0: i32) -> (i32, i32, i32) {
    %c0_i32 = arith.constant 0 : i32
    %c0_i32_0 = arith.constant 0 : i32
    %c0_i32_1 = arith.constant 0 : i32
    return %arg0, %c0_i32, %c0_i32_0 : i32, i32, i32
  }
}

</mosaic_0001>

<llo_original>
// kernel: tpu_custom_call.1
$region0: #{tpu_custom_call.1}
  #allocation0 [shape = 'u32[]', space=smem, size = 0x4, offset = 0x4, fixed_abs, tag = 'smem constant byte address 0x4 - core index']
  #allocation1 [shape = 'u32[144,128]{1,0:T(1,128)}', space=vmem, size = 0x12000, scoped, tag = 'internal scratch']
  %s0 = inlined_call_operand.vmem [shape: f32[2,20,160], index: 0, kind: input, shape index: {}]
  %s1 = inlined_call_operand.hbm [shape: f32[5,160,128], index: 1, kind: input, shape index: {}]
  %s2 = inlined_call_operand.hbm [shape: f32[2,16,128], index: 2, kind: output, shape index: {}]
  %s3 = sld [smem:[#allocation0]]
  $region45: #{tpu_custom_call.1} parent=0
    _
  %s5 = ssub.s32 1, %s3
  %s6 = scalar_select 0, %s5, %s3
  $region1: #{tpu_custom_call.1} parent=0
    #allocation2 [shape = 'u8[409600]{0}', space=vmem, size = 0x64000, scoped, tag = 'input window, operand 1, single buffered']
    #allocation3 [shape = 's32[2]{0}', space=sflag, size = 0x8, scoped, tag = 'scoped memory for tpu_custom_call.1']
    #allocation4 [shape = 's32[2]{0}', space=sflag, size = 0x8, scoped, tag = 'scoped memory for tpu_custom_call.1']
    #allocation5 [shape = 'u8[16384]{0}', space=vmem, size = 0x4000, scoped, tag = 'output window, operand 0']
    %7 = vsyncpa [#allocation3], 0
    %8 = vsyncpa [#allocation4], 0
    %s9 = scalar_lea.sflag [#allocation4], 1
    %10 = vsyncpa %s9, 0
    loop: start=0, step=1, limit=4
    $region2: #{tpu_custom_call.1} parent=1 // loop_pre_header
      _
    $region3: #{tpu_custom_call.1} parent=1 // loop_header
      %s12 = sphi 0, %s16
      %p13 = scmp.ge.s32.totalorder %s12, 4
      %s22 = sphi 0, %s24
      %s25 = sphi 0, %s22
      %s26 = sphi 0, %s25
      %s42 = sphi 0, %s26
      %s46 = sphi 0, %s46
      %s48 = sphi 0, %s46
      %s49 = sphi 0, %s48
      %s63 = sphi 0, %s49
      %s69 = sphi 0, %s71
      %s72 = sphi 0, %s69
      %s73 = sphi 0, %s72
      %s89 = sphi 0, %s73
    $region4: #{tpu_custom_call.1} parent=1 // loop_header_branch
      %15 = sbr.rel (%p13) target = $region8
    $region5: #{tpu_custom_call.1} parent=1 // loop_body
      %s17 = ssub.s32 %s12, 1
      %s18 = ssub.s32 %s12, 2
      %s19 = sadd.s32 %s12, 1
      %s20 = ssub.s32 %s12, %s19
      %p21 = scmp.eq.s32.totalorder %s20, 0
      %s23 = sadd.s32 %s22, 1
      %s24 = scalar_select %p21, %s22, %s23
      %p27 = pneg %p21
      %p28 = scmp.eq.s32.totalorder %s12, 1
      %p29 = por %p27, %p28
      %p30 = scmp.ne.s32.totalorder %s22, %s25
      %p31 = scmp.eq.s32.totalorder %s12, 0
      %p32 = por %p30, %p31
      %p33 = scmp.ne.s32.totalorder %s22, %s25
      %p34 = scmp.eq.s32.totalorder %s17, 1
      %p35 = por %p33, %p34
      %p36 = scmp.ne.s32.totalorder %s25, %s26
      %p37 = scmp.eq.s32.totalorder %s17, 0
      %p38 = por %p36, %p37
      %p39 = scmp.ne.s32.totalorder %s25, %s26
      %p40 = scmp.eq.s32.totalorder %s18, 1
      %p41 = por %p39, %p40
      %p43 = scmp.ne.s32.totalorder %s26, %s42
      %p44 = scmp.eq.s32.totalorder %s18, 0
      %p45 = por %p43, %p44
      %s47 = sadd.s32 %s46, 1
      %p50 = scmp.eq.s32.totalorder %s12, 1
      %p51 = scmp.ne.s32.totalorder %s46, %s48
      %p52 = scmp.eq.s32.totalorder %s12, 0
      %p53 = por %p51, %p52
      %p54 = scmp.ne.s32.totalorder %s46, %s48
      %p55 = scmp.eq.s32.totalorder %s17, 1
      %p56 = por %p54, %p55
      %p57 = scmp.ne.s32.totalorder %s48, %s49
      %p58 = scmp.eq.s32.totalorder %s17, 0
      %p59 = por %p57, %p58
      %p60 = scmp.ne.s32.totalorder %s48, %s49
      %p61 = scmp.eq.s32.totalorder %s18, 1
      %p62 = por %p60, %p61
      %p64 = scmp.ne.s32.totalorder %s49, %s63
      %p65 = scmp.eq.s32.totalorder %s18, 0
      %p66 = por %p64, %p65
      %s67 = ssub.s32 %s12, %s19
      %p68 = scmp.eq.s32.totalorder %s67, 0
      %s70 = sadd.s32 %s69, 1
      %s71 = scalar_select %p68, %s69, %s70
      %p74 = pneg %p68
      %p75 = scmp.eq.s32.totalorder %s12, 1
      %p76 = por %p74, %p75
      %p77 = scmp.ne.s32.totalorder %s69, %s72
      %p78 = scmp.eq.s32.totalorder %s12, 0
      %p79 = por %p77, %p78
      %p80 = scmp.ne.s32.totalorder %s69, %s72
      %p81 = scmp.eq.s32.totalorder %s17, 1
      %p82 = por %p80, %p81
      %p83 = scmp.ne.s32.totalorder %s72, %s73
      %p84 = scmp.eq.s32.totalorder %s17, 0
      %p85 = por %p83, %p84
      %p86 = scmp.ne.s32.totalorder %s72, %s73
      %p87 = scmp.eq.s32.totalorder %s18, 1
      %p88 = por %p86, %p87
      %p90 = scmp.ne.s32.totalorder %s73, %s89
      %p91 = scmp.eq.s32.totalorder %s18, 0
      %p92 = por %p90, %p91
      %p93 = scmp.le.s32.totalorder 1, %s12
      %p94 = scmp.lt.s32.totalorder %s12, 3
      %p95 = pnand %p93, %p94
      %p96 = pneg %p95
      // Predicated region
      $region9: #{tpu_custom_call.1} parent=5 // pred_check
        _
      $region10: #{tpu_custom_call.1} parent=5 // pred_check_branch
        %98 = sbr.rel (%p95) target = $region12
      $region11: #{tpu_custom_call.1} parent=5 // pred_region
        %s99 = ssub.s32 %s12, 1
        // Predicated region
        $region13: #{tpu_custom_call.1} parent=11 // pred_check
          %p100 = pneg %p59
        $region14: #{tpu_custom_call.1} parent=11 // pred_check_branch
          %102 = sbr.rel (%p100) target = $region16
        $region15: #{tpu_custom_call.1} parent=11 // pred_region
          %s104 = ssub.s32 12800, 12800
          %105 = vsyncadd [#allocation3], %s104
          %s106 = sshll.u32 [#allocation2], 4
          %s107 = int_to_ptr.vmem [resolvable:$true] %s106
          %112 = dma.hbm_to_vmem [thread:$0]  %s1, 12800, %s107, [#allocation3], 128, 128, 8
        $region16: #{tpu_custom_call.1} parent=11 // pred_fallthru
          _
      $region12: #{tpu_custom_call.1} parent=5 // pred_fallthru
        _
      %p113 = scmp.lt.s32.totalorder %s12, 2
      // Predicated region
      $region17: #{tpu_custom_call.1} parent=5 // pred_check
        %p114 = pneg %p113
      $region18: #{tpu_custom_call.1} parent=5 // pred_check_branch
        %116 = sbr.rel (%p114) target = $region20
      $region19: #{tpu_custom_call.1} parent=5 // pred_region
        // Predicated region
        $region21: #{tpu_custom_call.1} parent=19 // pred_check
          %p117 = pneg %p32
        $region22: #{tpu_custom_call.1} parent=19 // pred_check_branch
          %119 = sbr.rel (%p117) target = $region24
        $region23: #{tpu_custom_call.1} parent=19 // pred_region
          %p120 = scmp.lt.s32.totalorder %s12, 1
          %s121 = scalar_select %p120, %s12, 1
          %s122 = smul.addr %s121, 6
          %s123 = smul.addr %s122, 8
          %s124 = scalar_lea.vmem %s0, %s123
        $region24: #{tpu_custom_call.1} parent=19 // pred_fallthru
          _
      $region20: #{tpu_custom_call.1} parent=5 // pred_fallthru
        _
      %p125 = scmp.le.s32.totalorder 1, %s12
      %p126 = scmp.lt.s32.totalorder %s12, 3
      %p127 = pnand %p125, %p126
      %p128 = pneg %p127
      // Predicated region
      $region25: #{tpu_custom_call.1} parent=5 // pred_check
        _
      $region26: #{tpu_custom_call.1} parent=5 // pred_check_branch
        %130 = sbr.rel (%p127) target = $region28
      $region27: #{tpu_custom_call.1} parent=5 // pred_region
        %s131 = ssub.s32 %s12, 1
        // Predicated region
        $region29: #{tpu_custom_call.1} parent=27 // pred_check
          %p132 = pneg %p59
        $region30: #{tpu_custom_call.1} parent=27 // pred_check_branch
          %134 = sbr.rel (%p132) target = $region32
        $region31: #{tpu_custom_call.1} parent=27 // pred_region
          %135 = dma.done [#allocation3], 12800
        $region32: #{tpu_custom_call.1} parent=27 // pred_fallthru
          _
        %p136 = scmp.lt.s32.totalorder %s17, 1
        %s137 = scalar_select %p136, %s17, 1
        %s138 = smul.addr %s137, 6
        %s139 = smul.addr %s138, 8
        %s140 = scalar_lea.vmem %s0, %s139
        %p141 = pneg %p38
        %p142 = pneg %p35
        %p143 = pneg %p59
        %p144 = pneg %p56
        %p145 = pneg %p85
        %p146 = pneg %p82
        %s147 = sand.u32 %s72, 1
        %s148 = scalar_lea.sflag [#allocation4], %s147
        %s149 = sand.u32 %s72, 1
        %s150 = smul.addr %s149, 16
        %s151 = scalar_lea.vmem [#allocation5], %s150
        %p152 = scmp.lt.s32.totalorder %s17, 1
        %s153 = scalar_select %p152, %s17, 1
        %s154 = smul.addr %s153, 6
        %s155 = smul.addr %s154, 8
        %s156 = scalar_lea.vmem %s0, %s155
        %v157 = vld [vmem:[%s156] sm:$0xff]
        %v158 = vld [vmem:[%s156 + $0x8] sm:$0xff]
        %v159 = vld [vmem:[%s156 + $0x10] sm:$0xff]
        %v160 = vld [vmem:[%s156 + $0x18] sm:$0xff]
        %v161 = vld [vmem:[#allocation2] sm:$0xff]
        %v162 = vld [vmem:[#allocation2 + $0x8] sm:$0xff]
        %v163 = vld [vmem:[#allocation2 + $0x10] sm:$0xff]
        %v164 = vld [vmem:[#allocation2 + $0x18] sm:$0xff]
        %v165 = vld [vmem:[#allocation2 + $0x20] sm:$0xff]
        %v166 = vld [vmem:[#allocation2 + $0x28] sm:$0xff]
        %v167 = vld [vmem:[#allocation2 + $0x30] sm:$0xff]
        %v168 = vld [vmem:[#allocation2 + $0x38] sm:$0xff]
        %v169 = vld [vmem:[#allocation2 + $0x40] sm:$0xff]
        %v170 = vld [vmem:[#allocation2 + $0x48] sm:$0xff]
        %v171 = vld [vmem:[#allocation2 + $0x50] sm:$0xff]
        %v172 = vld [vmem:[#allocation2 + $0x58] sm:$0xff]
        %v173 = vld [vmem:[#allocation2 + $0x60] sm:$0xff]
        %v174 = vld [vmem:[#allocation2 + $0x68] sm:$0xff]
        %v175 = vld [vmem:[#allocation2 + $0x70] sm:$0xff]
        %v176 = vld [vmem:[#allocation2 + $0x78] sm:$0xff]
        %v177 = vld [vmem:[#allocation2 + $0x80] sm:$0xff]
        %v178 = vld [vmem:[#allocation2 + $0x88] sm:$0xff]
        %v179 = vld [vmem:[#allocation2 + $0x90] sm:$0xff]
        %v180 = vld [vmem:[#allocation2 + $0x98] sm:$0xff]
        %v181 = vld [vmem:[%s156] sm:$0xfe]
        %v182 = vld [vmem:[%s156 + $0x8] sm:$0xfe]
        %v183 = vld [vmem:[%s156 + $0x20] sm:$0x1]
        %v184 = vld [vmem:[%s156 + $0x28] sm:$0x1]
        %s185 = scalar_lea.vmem [#allocation2], 160
        %v186 = vld [vmem:[%s185] sm:$0xff]
        %v187 = vld [vmem:[%s185 + $0x8] sm:$0xff]
        %v188 = vld [vmem:[%s185 + $0x10] sm:$0xff]
        %v189 = vld [vmem:[%s185 + $0x18] sm:$0xff]
        %v190 = vld [vmem:[%s185 + $0x20] sm:$0xff]
        %v191 = vld [vmem:[%s185 + $0x28] sm:$0xff]
        %v192 = vld [vmem:[%s185 + $0x30] sm:$0xff]
        %v193 = vld [vmem:[%s185 + $0x38] sm:$0xff]
        %v194 = vld [vmem:[%s185 + $0x40] sm:$0xff]
        %v195 = vld [vmem:[%s185 + $0x48] sm:$0xff]
        %v196 = vld [vmem:[%s185 + $0x50] sm:$0xff]
        %v197 = vld [vmem:[%s185 + $0x58] sm:$0xff]
        %v198 = vld [vmem:[%s185 + $0x60] sm:$0xff]
        %v199 = vld [vmem:[%s185 + $0x68] sm:$0xff]
        %v200 = vld [vmem:[%s185 + $0x70] sm:$0xff]
        %v201 = vld [vmem:[%s185 + $0x78] sm:$0xff]
        %v202 = vld [vmem:[%s185 + $0x80] sm:$0xff]
        %v203 = vld [vmem:[%s185 + $0x88] sm:$0xff]
        %v204 = vld [vmem:[%s185 + $0x90] sm:$0xff]
        %v205 = vld [vmem:[%s185 + $0x98] sm:$0xff]
        %vm212 = vcmask 1046528
        %v213 = vrot.slane %v181, 1
        %v214 = vrot.slane %v159, 1
        %v215 = vsel %vm212, %v213, %v214
        %v216 = vrot.slane %v182, 1
        %v217 = vrot.slane %v160, 1
        %v218 = vsel %vm212, %v216, %v217
        %v219 = vrot.slane %v183, 1
        %v220 = vsel %vm212, %v214, %v219
        %v221 = vrot.slane %v184, 1
        %v222 = vsel %vm212, %v217, %v221
        %vm225 = vcmask 261120
        %v226 = vsel %vm225, %v218, 0
        %v228 = vsel %vm225, %v222, 0
        %230 = vmatprep.subr.mxu0 0.0
        %231 = vmatpush1.msra.mxu0 %v201
        %232 = vmatprep.subr.mxu0 0.0
        %233 = vmatpush1.msra.mxu0 %v200
        %234 = vmatprep.subr.mxu0 0.0
        %235 = vmatpush1.msra.mxu0 %v199
        %236 = vmatprep.subr.mxu0 0.0
        %237 = vmatpush1.msra.mxu0 %v198
        %238 = vmatprep.subr.mxu0 0.0
        %239 = vmatpush1.msra.mxu0 %v197
        %240 = vmatprep.subr.mxu0 0.0
        %241 = vmatpush1.msra.mxu0 %v196
        %242 = vmatprep.subr.mxu0 0.0
        %243 = vmatpush1.msra.mxu0 %v195
        %244 = vmatprep.subr.mxu0 0.0
        %245 = vmatpush1.msra.mxu0 %v194
        %246 = vmatprep.subr.mxu0 0.0
        %247 = vmatpush1.msra.mxu0 %v193
        %248 = vmatprep.subr.mxu0 0.0
        %249 = vmatpush1.msra.mxu0 %v192
        %250 = vmatprep.subr.mxu0 0.0
        %251 = vmatpush1.msra.mxu0 %v191
        %252 = vmatprep.subr.mxu0 0.0
        %253 = vmatpush1.msra.mxu0 %v190
        %254 = vmatprep.subr.mxu0 0.0
        %255 = vmatpush1.msra.mxu0 %v189
        %256 = vmatprep.subr.mxu0 0.0
        %257 = vmatpush1.msra.mxu0 %v188
        %258 = vmatprep.subr.mxu0 0.0
        %259 = vmatpush1.msra.mxu0 %v187
        %260 = vmatprep.subr.mxu0 0.0
        %261 = vmatpush1.msra.mxu0 %v186
        %262 = vmatprep.subr.mxu0 0.0
        %263 = vmatpush2.msra.mxu0 0.0
        %264 = vmatprep.subr.mxu0 0.0
        %265 = vmatpush2.msra.mxu0 0.0
        %266 = vmatprep.subr.mxu0 0.0
        %267 = vmatpush2.msra.mxu0 0.0
        %268 = vmatprep.subr.mxu0 0.0
        %269 = vmatpush2.msra.mxu0 0.0
        %270 = vmatprep.subr.mxu0 0.0
        %271 = vmatpush2.msra.mxu0 0.0
        %272 = vmatprep.subr.mxu0 0.0
        %273 = vmatpush2.msra.mxu0 0.0
        %274 = vmatprep.subr.mxu0 0.0
        %275 = vmatpush2.msra.mxu0 0.0
        %276 = vmatprep.subr.mxu0 0.0
        %277 = vmatpush2.msra.mxu0 0.0
        %278 = vmatprep.subr.mxu0 0.0
        %279 = vmatpush2.msra.mxu0 0.0
        %280 = vmatprep.subr.mxu0 0.0
        %281 = vmatpush2.msra.mxu0 0.0
        %282 = vmatprep.subr.mxu0 0.0
        %283 = vmatpush2.msra.mxu0 0.0
        %284 = vmatprep.subr.mxu0 0.0
        %285 = vmatpush2.msra.mxu0 0.0
        %286 = vmatprep.subr.mxu0 0.0
        %287 = vmatpush2.msra.mxu0 %v205
        %288 = vmatprep.subr.mxu0 0.0
        %289 = vmatpush2.msra.mxu0 %v204
        %290 = vmatprep.subr.mxu0 0.0
        %291 = vmatpush2.msra.mxu0 %v203
        %292 = vmatprep.subr.mxu0 0.0
        %293 = vmatpush2.msra.mxu0 %v202
        %294 = vmatprep.mubr.f32.mxu0 %v226
        %295 = vmatmul.mubr.f32.gmra.mxu0 %v215
        %v296 = vpop.f32.mrf.mxu0
        %v297 = vadd.f32 0.0, %v296
        %v298 = vpop.f32.mrf.mxu0
        %299 = vmatprep.mubr.f32.mxu0 %v228
        %300 = vmatmul.mubr.f32.gmra.mxu0 %v220
        %v301 = vpop.f32.mrf.mxu0
        %v302 = vadd.f32 0.0, %v301
        %v303 = vpop.f32.mrf.mxu0
        %304 = vdwg.mxu0
        %v306 = vsel %vm225, %v158, 0
        %v308 = vsel %vm225, %v160, 0
        %310 = vmatprep.subr.mxu0 0.0
        %311 = vmatpush1.msra.mxu0 %v176
        %312 = vmatprep.subr.mxu0 0.0
        %313 = vmatpush1.msra.mxu0 %v175
        %314 = vmatprep.subr.mxu0 0.0
        %315 = vmatpush1.msra.mxu0 %v174
        %316 = vmatprep.subr.mxu0 0.0
        %317 = vmatpush1.msra.mxu0 %v173
        %318 = vmatprep.subr.mxu0 0.0
        %319 = vmatpush1.msra.mxu0 %v172
        %320 = vmatprep.subr.mxu0 0.0
        %321 = vmatpush1.msra.mxu0 %v171
        %322 = vmatprep.subr.mxu0 0.0
        %323 = vmatpush1.msra.mxu0 %v170
        %324 = vmatprep.subr.mxu0 0.0
        %325 = vmatpush1.msra.mxu0 %v169
        %326 = vmatprep.subr.mxu0 0.0
        %327 = vmatpush1.msra.mxu0 %v168
        %328 = vmatprep.subr.mxu0 0.0
        %329 = vmatpush1.msra.mxu0 %v167
        %330 = vmatprep.subr.mxu0 0.0
        %331 = vmatpush1.msra.mxu0 %v166
        %332 = vmatprep.subr.mxu0 0.0
        %333 = vmatpush1.msra.mxu0 %v165
        %334 = vmatprep.subr.mxu0 0.0
        %335 = vmatpush1.msra.mxu0 %v164
        %336 = vmatprep.subr.mxu0 0.0
        %337 = vmatpush1.msra.mxu0 %v163
        %338 = vmatprep.subr.mxu0 0.0
        %339 = vmatpush1.msra.mxu0 %v162
        %340 = vmatprep.subr.mxu0 0.0
        %341 = vmatpush1.msra.mxu0 %v161
        %342 = vmatprep.subr.mxu0 0.0
        %343 = vmatpush2.msra.mxu0 0.0
        %344 = vmatprep.subr.mxu0 0.0
        %345 = vmatpush2.msra.mxu0 0.0
        %346 = vmatprep.subr.mxu0 0.0
        %347 = vmatpush2.msra.mxu0 0.0
        %348 = vmatprep.subr.mxu0 0.0
        %349 = vmatpush2.msra.mxu0 0.0
        %350 = vmatprep.subr.mxu0 0.0
        %351 = vmatpush2.msra.mxu0 0.0
        %352 = vmatprep.subr.mxu0 0.0
        %353 = vmatpush2.msra.mxu0 0.0
        %354 = vmatprep.subr.mxu0 0.0
        %355 = vmatpush2.msra.mxu0 0.0
        %356 = vmatprep.subr.mxu0 0.0
        %357 = vmatpush2.msra.mxu0 0.0
        %358 = vmatprep.subr.mxu0 0.0
        %359 = vmatpush2.msra.mxu0 0.0
        %360 = vmatprep.subr.mxu0 0.0
        %361 = vmatpush2.msra.mxu0 0.0
        %362 = vmatprep.subr.mxu0 0.0
        %363 = vmatpush2.msra.mxu0 0.0
        %364 = vmatprep.subr.mxu0 0.0
        %365 = vmatpush2.msra.mxu0 0.0
        %366 = vmatprep.subr.mxu0 0.0
        %367 = vmatpush2.msra.mxu0 %v180
        %368 = vmatprep.subr.mxu0 0.0
        %369 = vmatpush2.msra.mxu0 %v179
        %370 = vmatprep.subr.mxu0 0.0
        %371 = vmatpush2.msra.mxu0 %v178
        %372 = vmatprep.subr.mxu0 0.0
        %373 = vmatpush2.msra.mxu0 %v177
        %374 = vmatprep.mubr.f32.mxu0 %v306
        %375 = vmatmul.mubr.f32.gmra.mxu0 %v157
        %v376 = vpop.f32.mrf.mxu0
        %v377 = vadd.f32 %v297, %v376
        %v378 = vpop.f32.mrf.mxu0
        %379 = vmatprep.mubr.f32.mxu0 %v308
        %380 = vmatmul.mubr.f32.gmra.mxu0 %v159
        %v381 = vpop.f32.mrf.mxu0
        %v382 = vadd.f32 %v302, %v381
        %v383 = vpop.f32.mrf.mxu0
        %384 = vdwg.mxu0
        %v385 = vld [vmem:[%s156] sm:$0xfc]
        %v386 = vld [vmem:[%s156 + $0x8] sm:$0xfc]
        %v387 = vld [vmem:[%s156 + $0x20] sm:$0x3]
        %v388 = vld [vmem:[%s156 + $0x28] sm:$0x3]
        %s389 = scalar_lea.vmem [#allocation2], 320
        %v390 = vld [vmem:[%s389] sm:$0xff]
        %v391 = vld [vmem:[%s389 + $0x8] sm:$0xff]
        %v392 = vld [vmem:[%s389 + $0x10] sm:$0xff]
        %v393 = vld [vmem:[%s389 + $0x18] sm:$0xff]
        %v394 = vld [vmem:[%s389 + $0x20] sm:$0xff]
        %v395 = vld [vmem:[%s389 + $0x28] sm:$0xff]
        %v396 = vld [vmem:[%s389 + $0x30] sm:$0xff]
        %v397 = vld [vmem:[%s389 + $0x38] sm:$0xff]
        %v398 = vld [vmem:[%s389 + $0x40] sm:$0xff]
        %v399 = vld [vmem:[%s389 + $0x48] sm:$0xff]
        %v400 = vld [vmem:[%s389 + $0x50] sm:$0xff]
        %v401 = vld [vmem:[%s389 + $0x58] sm:$0xff]
        %v402 = vld [vmem:[%s389 + $0x60] sm:$0xff]
        %v403 = vld [vmem:[%s389 + $0x68] sm:$0xff]
        %v404 = vld [vmem:[%s389 + $0x70] sm:$0xff]
        %v405 = vld [vmem:[%s389 + $0x78] sm:$0xff]
        %v406 = vld [vmem:[%s389 + $0x80] sm:$0xff]
        %v407 = vld [vmem:[%s389 + $0x88] sm:$0xff]
        %v408 = vld [vmem:[%s389 + $0x90] sm:$0xff]
        %v409 = vld [vmem:[%s389 + $0x98] sm:$0xff]
        %vm414 = vcmask 1045504
        %v415 = vrot.slane %v385, 2
        %v416 = vrot.slane %v159, 2
        %v417 = vsel %vm414, %v415, %v416
        %v418 = vrot.slane %v386, 2
        %v419 = vrot.slane %v160, 2
        %v420 = vsel %vm414, %v418, %v419
        %v421 = vrot.slane %v387, 2
        %v422 = vsel %vm414, %v416, %v421
        %v423 = vrot.slane %v388, 2
        %v424 = vsel %vm414, %v419, %v423
        %v427 = vsel %vm225, %v420, 0
        %v429 = vsel %vm225, %v424, 0
        %431 = vmatprep.subr.mxu0 0.0
        %432 = vmatpush1.msra.mxu0 %v405
        %433 = vmatprep.subr.mxu0 0.0
        %434 = vmatpush1.msra.mxu0 %v404
        %435 = vmatprep.subr.mxu0 0.0
        %436 = vmatpush1.msra.mxu0 %v403
        %437 = vmatprep.subr.mxu0 0.0
        %438 = vmatpush1.msra.mxu0 %v402
        %439 = vmatprep.subr.mxu0 0.0
        %440 = vmatpush1.msra.mxu0 %v401
        %441 = vmatprep.subr.mxu0 0.0
        %442 = vmatpush1.msra.mxu0 %v400
        %443 = vmatprep.subr.mxu0 0.0
        %444 = vmatpush1.msra.mxu0 %v399
        %445 = vmatprep.subr.mxu0 0.0
        %446 = vmatpush1.msra.mxu0 %v398
        %447 = vmatprep.subr.mxu0 0.0
        %448 = vmatpush1.msra.mxu0 %v397
        %449 = vmatprep.subr.mxu0 0.0
        %450 = vmatpush1.msra.mxu0 %v396
        %451 = vmatprep.subr.mxu0 0.0
        %452 = vmatpush1.msra.mxu0 %v395
        %453 = vmatprep.subr.mxu0 0.0
        %454 = vmatpush1.msra.mxu0 %v394
        %455 = vmatprep.subr.mxu0 0.0
        %456 = vmatpush1.msra.mxu0 %v393
        %457 = vmatprep.subr.mxu0 0.0
        %458 = vmatpush1.msra.mxu0 %v392
        %459 = vmatprep.subr.mxu0 0.0
        %460 = vmatpush1.msra.mxu0 %v391
        %461 = vmatprep.subr.mxu0 0.0
        %462 = vmatpush1.msra.mxu0 %v390
        %463 = vmatprep.subr.mxu0 0.0
        %464 = vmatpush2.msra.mxu0 0.0
        %465 = vmatprep.subr.mxu0 0.0
        %466 = vmatpush2.msra.mxu0 0.0
        %467 = vmatprep.subr.mxu0 0.0
        %468 = vmatpush2.msra.mxu0 0.0
        %469 = vmatprep.subr.mxu0 0.0
        %470 = vmatpush2.msra.mxu0 0.0
        %471 = vmatprep.subr.mxu0 0.0
        %472 = vmatpush2.msra.mxu0 0.0
        %473 = vmatprep.subr.mxu0 0.0
        %474 = vmatpush2.msra.mxu0 0.0
        %475 = vmatprep.subr.mxu0 0.0
        %476 = vmatpush2.msra.mxu0 0.0
        %477 = vmatprep.subr.mxu0 0.0
        %478 = vmatpush2.msra.mxu0 0.0
        %479 = vmatprep.subr.mxu0 0.0
        %480 = vmatpush2.msra.mxu0 0.0
        %481 = vmatprep.subr.mxu0 0.0
        %482 = vmatpush2.msra.mxu0 0.0
        %483 = vmatprep.subr.mxu0 0.0
        %484 = vmatpush2.msra.mxu0 0.0
        %485 = vmatprep.subr.mxu0 0.0
        %486 = vmatpush2.msra.mxu0 0.0
        %487 = vmatprep.subr.mxu0 0.0
        %488 = vmatpush2.msra.mxu0 %v409
        %489 = vmatprep.subr.mxu0 0.0
        %490 = vmatpush2.msra.mxu0 %v408
        %491 = vmatprep.subr.mxu0 0.0
        %492 = vmatpush2.msra.mxu0 %v407
        %493 = vmatprep.subr.mxu0 0.0
        %494 = vmatpush2.msra.mxu0 %v406
        %495 = vmatprep.mubr.f32.mxu0 %v427
        %496 = vmatmul.mubr.f32.gmra.mxu0 %v417
        %v497 = vpop.f32.mrf.mxu0
        %v498 = vadd.f32 0.0, %v497
        %v499 = vpop.f32.mrf.mxu0
        %500 = vmatprep.mubr.f32.mxu0 %v429
        %501 = vmatmul.mubr.f32.gmra.mxu0 %v422
        %v502 = vpop.f32.mrf.mxu0
        %v503 = vadd.f32 0.0, %v502
        %v504 = vpop.f32.mrf.mxu0
        %505 = vdwg.mxu0
        %v506 = vadd.f32 %v377, %v498
        %v507 = vadd.f32 %v382, %v503
        %v508 = vld [vmem:[%s156] sm:$0xf8]
        %v509 = vld [vmem:[%s156 + $0x8] sm:$0xf8]
        %v510 = vld [vmem:[%s156 + $0x20] sm:$0x7]
        %v511 = vld [vmem:[%s156 + $0x28] sm:$0x7]
        %s512 = scalar_lea.vmem [#allocation2], 480
        %v513 = vld [vmem:[%s512] sm:$0xff]
        %v514 = vld [vmem:[%s512 + $0x8] sm:$0xff]
        %v515 = vld [vmem:[%s512 + $0x10] sm:$0xff]
        %v516 = vld [vmem:[%s512 + $0x18] sm:$0xff]
        %v517 = vld [vmem:[%s512 + $0x20] sm:$0xff]
        %v518 = vld [vmem:[%s512 + $0x28] sm:$0xff]
        %v519 = vld [vmem:[%s512 + $0x30] sm:$0xff]
        %v520 = vld [vmem:[%s512 + $0x38] sm:$0xff]
        %v521 = vld [vmem:[%s512 + $0x40] sm:$0xff]
        %v522 = vld [vmem:[%s512 + $0x48] sm:$0xff]
        %v523 = vld [vmem:[%s512 + $0x50] sm:$0xff]
        %v524 = vld [vmem:[%s512 + $0x58] sm:$0xff]
        %v525 = vld [vmem:[%s512 + $0x60] sm:$0xff]
        %v526 = vld [vmem:[%s512 + $0x68] sm:$0xff]
        %v527 = vld [vmem:[%s512 + $0x70] sm:$0xff]
        %v528 = vld [vmem:[%s512 + $0x78] sm:$0xff]
        %v529 = vld [vmem:[%s512 + $0x80] sm:$0xff]
        %v530 = vld [vmem:[%s512 + $0x88] sm:$0xff]
        %v531 = vld [vmem:[%s512 + $0x90] sm:$0xff]
        %v532 = vld [vmem:[%s512 + $0x98] sm:$0xff]
        %vm537 = vcmask 1044480
        %v538 = vrot.slane %v508, 3
        %v539 = vrot.slane %v159, 3
        %v540 = vsel %vm537, %v538, %v539
        %v541 = vrot.slane %v509, 3
        %v542 = vrot.slane %v160, 3
        %v543 = vsel %vm537, %v541, %v542
        %v544 = vrot.slane %v510, 3
        %v545 = vsel %vm537, %v539, %v544
        %v546 = vrot.slane %v511, 3
        %v547 = vsel %vm537, %v542, %v546
        %v550 = vsel %vm225, %v543, 0
        %v552 = vsel %vm225, %v547, 0
        %554 = vmatprep.subr.mxu0 0.0
        %555 = vmatpush1.msra.mxu0 %v528
        %556 = vmatprep.subr.mxu0 0.0
        %557 = vmatpush1.msra.mxu0 %v527
        %558 = vmatprep.subr.mxu0 0.0
        %559 = vmatpush1.msra.mxu0 %v526
        %560 = vmatprep.subr.mxu0 0.0
        %561 = vmatpush1.msra.mxu0 %v525
        %562 = vmatprep.subr.mxu0 0.0
        %563 = vmatpush1.msra.mxu0 %v524
        %564 = vmatprep.subr.mxu0 0.0
        %565 = vmatpush1.msra.mxu0 %v523
        %566 = vmatprep.subr.mxu0 0.0
        %567 = vmatpush1.msra.mxu0 %v522
        %568 = vmatprep.subr.mxu0 0.0
        %569 = vmatpush1.msra.mxu0 %v521
        %570 = vmatprep.subr.mxu0 0.0
        %571 = vmatpush1.msra.mxu0 %v520
        %572 = vmatprep.subr.mxu0 0.0
        %573 = vmatpush1.msra.mxu0 %v519
        %574 = vmatprep.subr.mxu0 0.0
        %575 = vmatpush1.msra.mxu0 %v518
        %576 = vmatprep.subr.mxu0 0.0
        %577 = vmatpush1.msra.mxu0 %v517
        %578 = vmatprep.subr.mxu0 0.0
        %579 = vmatpush1.msra.mxu0 %v516
        %580 = vmatprep.subr.mxu0 0.0
        %581 = vmatpush1.msra.mxu0 %v515
        %582 = vmatprep.subr.mxu0 0.0
        %583 = vmatpush1.msra.mxu0 %v514
        %584 = vmatprep.subr.mxu0 0.0
        %585 = vmatpush1.msra.mxu0 %v513
        %586 = vmatprep.subr.mxu0 0.0
        %587 = vmatpush2.msra.mxu0 0.0
        %588 = vmatprep.subr.mxu0 0.0
        %589 = vmatpush2.msra.mxu0 0.0
        %590 = vmatprep.subr.mxu0 0.0
        %591 = vmatpush2.msra.mxu0 0.0
        %592 = vmatprep.subr.mxu0 0.0
        %593 = vmatpush2.msra.mxu0 0.0
        %594 = vmatprep.subr.mxu0 0.0
        %595 = vmatpush2.msra.mxu0 0.0
        %596 = vmatprep.subr.mxu0 0.0
        %597 = vmatpush2.msra.mxu0 0.0
        %598 = vmatprep.subr.mxu0 0.0
        %599 = vmatpush2.msra.mxu0 0.0
        %600 = vmatprep.subr.mxu0 0.0
        %601 = vmatpush2.msra.mxu0 0.0
        %602 = vmatprep.subr.mxu0 0.0
        %603 = vmatpush2.msra.mxu0 0.0
        %604 = vmatprep.subr.mxu0 0.0
        %605 = vmatpush2.msra.mxu0 0.0
        %606 = vmatprep.subr.mxu0 0.0
        %607 = vmatpush2.msra.mxu0 0.0
        %608 = vmatprep.subr.mxu0 0.0
        %609 = vmatpush2.msra.mxu0 0.0
        %610 = vmatprep.subr.mxu0 0.0
        %611 = vmatpush2.msra.mxu0 %v532
        %612 = vmatprep.subr.mxu0 0.0
        %613 = vmatpush2.msra.mxu0 %v531
        %614 = vmatprep.subr.mxu0 0.0
        %615 = vmatpush2.msra.mxu0 %v530
        %616 = vmatprep.subr.mxu0 0.0
        %617 = vmatpush2.msra.mxu0 %v529
        %618 = vmatprep.mubr.f32.mxu0 %v550
        %619 = vmatmul.mubr.f32.gmra.mxu0 %v540
        %v620 = vpop.f32.mrf.mxu0
        %v621 = vadd.f32 0.0, %v620
        %v622 = vpop.f32.mrf.mxu0
        %623 = vmatprep.mubr.f32.mxu0 %v552
        %624 = vmatmul.mubr.f32.gmra.mxu0 %v545
        %v625 = vpop.f32.mrf.mxu0
        %v626 = vadd.f32 0.0, %v625
        %v627 = vpop.f32.mrf.mxu0
        %628 = vdwg.mxu0
        %v629 = vadd.f32 %v506, %v621
        %v630 = vadd.f32 %v507, %v626
        %v631 = vld [vmem:[%s156] sm:$0xf0]
        %v632 = vld [vmem:[%s156 + $0x8] sm:$0xf0]
        %v633 = vld [vmem:[%s156 + $0x20] sm:$0xf]
        %v634 = vld [vmem:[%s156 + $0x28] sm:$0xf]
        %s635 = scalar_lea.vmem [#allocation2], 640
        %v636 = vld [vmem:[%s635] sm:$0xff]
        %v637 = vld [vmem:[%s635 + $0x8] sm:$0xff]
        %v638 = vld [vmem:[%s635 + $0x10] sm:$0xff]
        %v639 = vld [vmem:[%s635 + $0x18] sm:$0xff]
        %v640 = vld [vmem:[%s635 + $0x20] sm:$0xff]
        %v641 = vld [vmem:[%s635 + $0x28] sm:$0xff]
        %v642 = vld [vmem:[%s635 + $0x30] sm:$0xff]
        %v643 = vld [vmem:[%s635 + $0x38] sm:$0xff]
        %v644 = vld [vmem:[%s635 + $0x40] sm:$0xff]
        %v645 = vld [vmem:[%s635 + $0x48] sm:$0xff]
        %v646 = vld [vmem:[%s635 + $0x50] sm:$0xff]
        %v647 = vld [vmem:[%s635 + $0x58] sm:$0xff]
        %v648 = vld [vmem:[%s635 + $0x60] sm:$0xff]
        %v649 = vld [vmem:[%s635 + $0x68] sm:$0xff]
        %v650 = vld [vmem:[%s635 + $0x70] sm:$0xff]
        %v651 = vld [vmem:[%s635 + $0x78] sm:$0xff]
        %v652 = vld [vmem:[%s635 + $0x80] sm:$0xff]
        %v653 = vld [vmem:[%s635 + $0x88] sm:$0xff]
        %v654 = vld [vmem:[%s635 + $0x90] sm:$0xff]
        %v655 = vld [vmem:[%s635 + $0x98] sm:$0xff]
        %vm660 = vcmask 1043456
        %v661 = vrot.slane %v631, 4
        %v662 = vrot.slane %v159, 4
        %v663 = vsel %vm660, %v661, %v662
        %v664 = vrot.slane %v632, 4
        %v665 = vrot.slane %v160, 4
        %v666 = vsel %vm660, %v664, %v665
        %v667 = vrot.slane %v633, 4
        %v668 = vsel %vm660, %v662, %v667
        %v669 = vrot.slane %v634, 4
        %v670 = vsel %vm660, %v665, %v669
        %v673 = vsel %vm225, %v666, 0
        %v675 = vsel %vm225, %v670, 0
        %677 = vmatprep.subr.mxu0 0.0
        %678 = vmatpush1.msra.mxu0 %v651
        %679 = vmatprep.subr.mxu0 0.0
        %680 = vmatpush1.msra.mxu0 %v650
        %681 = vmatprep.subr.mxu0 0.0
        %682 = vmatpush1.msra.mxu0 %v649
        %683 = vmatprep.subr.mxu0 0.0
        %684 = vmatpush1.msra.mxu0 %v648
        %685 = vmatprep.subr.mxu0 0.0
        %686 = vmatpush1.msra.mxu0 %v647
        %687 = vmatprep.subr.mxu0 0.0
        %688 = vmatpush1.msra.mxu0 %v646
        %689 = vmatprep.subr.mxu0 0.0
        %690 = vmatpush1.msra.mxu0 %v645
        %691 = vmatprep.subr.mxu0 0.0
        %692 = vmatpush1.msra.mxu0 %v644
        %693 = vmatprep.subr.mxu0 0.0
        %694 = vmatpush1.msra.mxu0 %v643
        %695 = vmatprep.subr.mxu0 0.0
        %696 = vmatpush1.msra.mxu0 %v642
        %697 = vmatprep.subr.mxu0 0.0
        %698 = vmatpush1.msra.mxu0 %v641
        %699 = vmatprep.subr.mxu0 0.0
        %700 = vmatpush1.msra.mxu0 %v640
        %701 = vmatprep.subr.mxu0 0.0
        %702 = vmatpush1.msra.mxu0 %v639
        %703 = vmatprep.subr.mxu0 0.0
        %704 = vmatpush1.msra.mxu0 %v638
        %705 = vmatprep.subr.mxu0 0.0
        %706 = vmatpush1.msra.mxu0 %v637
        %707 = vmatprep.subr.mxu0 0.0
        %708 = vmatpush1.msra.mxu0 %v636
        %709 = vmatprep.subr.mxu0 0.0
        %710 = vmatpush2.msra.mxu0 0.0
        %711 = vmatprep.subr.mxu0 0.0
        %712 = vmatpush2.msra.mxu0 0.0
        %713 = vmatprep.subr.mxu0 0.0
        %714 = vmatpush2.msra.mxu0 0.0
        %715 = vmatprep.subr.mxu0 0.0
        %716 = vmatpush2.msra.mxu0 0.0
        %717 = vmatprep.subr.mxu0 0.0
        %718 = vmatpush2.msra.mxu0 0.0
        %719 = vmatprep.subr.mxu0 0.0
        %720 = vmatpush2.msra.mxu0 0.0
        %721 = vmatprep.subr.mxu0 0.0
        %722 = vmatpush2.msra.mxu0 0.0
        %723 = vmatprep.subr.mxu0 0.0
        %724 = vmatpush2.msra.mxu0 0.0
        %725 = vmatprep.subr.mxu0 0.0
        %726 = vmatpush2.msra.mxu0 0.0
        %727 = vmatprep.subr.mxu0 0.0
        %728 = vmatpush2.msra.mxu0 0.0
        %729 = vmatprep.subr.mxu0 0.0
        %730 = vmatpush2.msra.mxu0 0.0
        %731 = vmatprep.subr.mxu0 0.0
        %732 = vmatpush2.msra.mxu0 0.0
        %733 = vmatprep.subr.mxu0 0.0
        %734 = vmatpush2.msra.mxu0 %v655
        %735 = vmatprep.subr.mxu0 0.0
        %736 = vmatpush2.msra.mxu0 %v654
        %737 = vmatprep.subr.mxu0 0.0
        %738 = vmatpush2.msra.mxu0 %v653
        %739 = vmatprep.subr.mxu0 0.0
        %740 = vmatpush2.msra.mxu0 %v652
        %741 = vmatprep.mubr.f32.mxu0 %v673
        %742 = vmatmul.mubr.f32.gmra.mxu0 %v663
        %v743 = vpop.f32.mrf.mxu0
        %v744 = vadd.f32 0.0, %v743
        %v745 = vpop.f32.mrf.mxu0
        %746 = vmatprep.mubr.f32.mxu0 %v675
        %747 = vmatmul.mubr.f32.gmra.mxu0 %v668
        %v748 = vpop.f32.mrf.mxu0
        %v749 = vadd.f32 0.0, %v748
        %v750 = vpop.f32.mrf.mxu0
        %751 = vdwg.mxu0
        %v752 = vadd.f32 %v629, %v744
        %v753 = vadd.f32 %v630, %v749
        %vm754 = vcmp.ge.f32.partialorder %v752, 0.0
        %vm755 = vcmp.ge.f32.partialorder %v753, 0.0
        %v756 = vmul.f32 %v752, 0.01
        %v757 = vmul.f32 %v753, 0.01
        %v758 = vsel %vm754, %v752, %v756
        %v759 = vsel %vm755, %v753, %v757
        %760 = vst [vmem:[%s151] sm:$0xff] %v758
        %761 = vst [vmem:[%s151 + $0x8] sm:$0xff] %v759
        %s762 = sand.u32 %s72, 1
        %s763 = scalar_lea.sflag [#allocation4], %s762
        %s764 = sand.u32 %s72, 1
        %s765 = smul.addr %s764, 16
        %s766 = scalar_lea.vmem [#allocation5], %s765
        // Predicated region
        $region33: #{tpu_custom_call.1} parent=27 // pred_check
          %p767 = pneg %p82
        $region34: #{tpu_custom_call.1} parent=27 // pred_check_branch
          %769 = sbr.rel (%p767) target = $region36
        $region35: #{tpu_custom_call.1} parent=27 // pred_region
          %s771 = ssub.s32 256, 256
          %772 = vsyncadd %s763, %s771
          %s773 = smul.addr %s17, 2
          %s774 = smul.addr %s773, 128
          %s775 = scalar_lea.hbm %s2, %s774
          %s776 = sshll.u32 %s766, 4
          %s777 = int_to_ptr.vmem [resolvable:$true] %s776
          %782 = dma.vmem_to_hbm [thread:$0]  %s777, 256, %s775, %s763, 128, 128, 8
        $region36: #{tpu_custom_call.1} parent=27 // pred_fallthru
          _
      $region28: #{tpu_custom_call.1} parent=5 // pred_fallthru
        _
      %p783 = scmp.le.s32.totalorder 2, %s12
      // Predicated region
      $region37: #{tpu_custom_call.1} parent=5 // pred_check
        %p784 = pneg %p783
      $region38: #{tpu_custom_call.1} parent=5 // pred_check_branch
        %786 = sbr.rel (%p784) target = $region40
      $region39: #{tpu_custom_call.1} parent=5 // pred_region
        %s787 = ssub.s32 %s12, 2
        // Predicated region
        $region41: #{tpu_custom_call.1} parent=39 // pred_check
          %p788 = pneg %p88
        $region42: #{tpu_custom_call.1} parent=39 // pred_check_branch
          %790 = sbr.rel (%p788) target = $region44
        $region43: #{tpu_custom_call.1} parent=39 // pred_region
          %s791 = sand.u32 %s73, 1
          %s792 = scalar_lea.sflag [#allocation4], %s791
          %s793 = sand.u32 %s73, 1
          %s794 = smul.addr %s793, 16
          %s795 = scalar_lea.vmem [#allocation5], %s794
          %796 = dma.done %s792, 256
        $region44: #{tpu_custom_call.1} parent=39 // pred_fallthru
          _
      $region40: #{tpu_custom_call.1} parent=5 // pred_fallthru
        _
    $region6: #{tpu_custom_call.1} parent=1 // loop_footer
      %s16 = sadd.s32 1, %s12
    $region7: #{tpu_custom_call.1} parent=1 // loop_footer_branch
      %11 = sbr.rel target = $region3
    $region8: #{tpu_custom_call.1} parent=1 // loop_exit
      _
    %797 = vsyncpa [#allocation3], 1
    %s798 = scalar_lea.sflag [#allocation3], 1
    %799 = vsyncpa %s798, 1
    %800 = vsyncpa [#allocation4], 1
    %s801 = scalar_lea.sflag [#allocation4], 1
    %802 = vsyncpa %s801, 1

</llo_original>
